<compile_context>
chip_gen: v7x
topology: tpu7x:2x2x1
jax: 0.10.0
libtpu: 0.0.40
codegen_flags: <defaults>
</compile_context>

<pallas_src>
import functools

import jax
import jax.numpy as jnp
from jax.experimental import pallas as pl
from jax.experimental.pallas import tpu as pltpu


def _predictor_kernel(x_ref, w1_ref, b1_ref, w2_ref, b2_ref, out_ref):
    """Fused Linear -> (folded BN) -> ReLU -> Linear for one batch tile.

    x_ref:  (TB, dim)       input rows (compute dtype, e.g. bf16)
    w1_ref: (dim, P)        fc1 weight with BN scale folded in (compute dtype)
    b1_ref: (1, P)          fc1 bias with BN shift folded in (f32)
    w2_ref: (P, dim)        fc2 weight (compute dtype)
    b2_ref: (1, dim)        fc2 bias (f32)
    out_ref:(TB, dim)       output rows (f32)
    """
    # Layer 1: Linear + folded BatchNorm(eval) + ReLU.  bf16 MXU, f32 accumulate.
    h = jnp.dot(x_ref[...], w1_ref[...], preferred_element_type=jnp.float32)
    h = jnp.maximum(h + b1_ref[...], 0.0)

    # Layer 2: Linear.  The intermediate never leaves VMEM.
    y = jnp.dot(h.astype(w2_ref.dtype), w2_ref[...],
                preferred_element_type=jnp.float32)
    out_ref[...] = (y + b2_ref[...]).astype(out_ref.dtype)


def _choose_batch_tile(B, batch_tile):
    """Large tile (amortize grid overhead / fill MXU), multiple of 8 unless it
    covers the whole batch, and >= 2 grid steps when possible (v7x megacore)."""
    if B < 16:
        return B                                  # one tiny block over the whole batch
    tb = min(batch_tile, B)
    if tb == B:                                   # would be a single grid step
        tb = (((B + 1) // 2) + 7) // 8 * 8        # split into ~2 blocks for 2 TCs
    else:
        tb = max(8, (tb // 8) * 8)
    return tb


def _vmem_limit_bytes(tb, dim, P, compute_itemsize):
    est = (
        2 * tb * dim * compute_itemsize           # double-buffered x tiles
        + 2 * tb * dim * 4                        # double-buffered f32 out tiles
        + 2 * 2 * dim * P * compute_itemsize      # w1 + w2 (worst-case 2 buffers each)
        + 2 * (P + dim) * 4                       # biases
        + tb * P * 4 + tb * dim * 4               # f32 intermediates h, y
    )
    # >= 32 MiB (above every generation's default scoped limit),
    # <= 64 MiB (fits v7x physical VMEM; well under v5e/v6e's 128 MiB).
    return int(min(64 * 1024 * 1024, max(32 * 1024 * 1024, 2 * est)))


def predictor_forward(x, p, *, batch_tile=256, eps=1e-5, compute_dtype=jnp.bfloat16):
    """x: (B, dim) -> (B, dim) f32.  Fused single-kernel forward."""
    B, dim = x.shape
    pred_dim = p["w1"].shape[0]                   # PyTorch fc1 weight: (pred_dim, dim)

    # ---- Host-side, one-time parameter folding (eval-mode BatchNorm1d) ----
    # BN(x@W1^T + b1) = (x@W1^T) * s + ((b1 - mean) * s + beta),  s = gamma*rsqrt(var+eps)
    s = p["bn_gamma"] * jax.lax.rsqrt(p["bn_var"] + eps)           # (pred_dim,)
    w1 = jnp.transpose(p["w1"], (1, 0)) * s[None, :]               # (dim, pred_dim) f32
    b1 = (p["b1"] - p["bn_mean"]) * s + p["bn_beta"]               # (pred_dim,)   f32
    w2 = jnp.transpose(p["w2"], (1, 0))                            # (pred_dim, dim)
    b2 = p["b2"]                                                   # (dim,)

    # ---- Zero-pad pred_dim to a lane multiple (exact: relu(0)=0 feeds zero rows) ----
    P = ((pred_dim + 127) // 128) * 128
    if P != pred_dim:
        w1 = jnp.pad(w1, ((0, 0), (0, P - pred_dim)))
        b1 = jnp.pad(b1, ((0, P - pred_dim),))
        w2 = jnp.pad(w2, ((0, P - pred_dim), (0, 0)))

    # MXU operands in compute_dtype (bf16 by default); biases stay f32.
    xk = x.astype(compute_dtype)
    w1 = w1.astype(compute_dtype)
    w2 = w2.astype(compute_dtype)
    b1 = b1[None, :].astype(jnp.float32)
    b2 = b2[None, :].astype(jnp.float32)

    # ---- Batch tiling: no host pad/slice; Pallas masks the ragged last block ----
    tb = _choose_batch_tile(B, batch_tile)
    grid = (pl.cdiv(B, tb),)
    vmem_limit = _vmem_limit_bytes(tb, dim, P, jnp.dtype(compute_dtype).itemsize)

    out = pl.pallas_call(
        _predictor_kernel,
        out_shape=jax.ShapeDtypeStruct((B, dim), jnp.float32),
        grid=grid,
        in_specs=[
            pl.BlockSpec((tb, dim), lambda i: (i, 0)),
            # Constant index_maps -> weights/biases stay resident in VMEM.
            pl.BlockSpec((dim, P), lambda i: (0, 0)),
            pl.BlockSpec((1, P), lambda i: (0, 0)),
            pl.BlockSpec((P, dim), lambda i: (0, 0)),
            pl.BlockSpec((1, dim), lambda i: (0, 0)),
        ],
        out_specs=pl.BlockSpec((tb, dim), lambda i: (i, 0)),
        compiler_params=pltpu.CompilerParams(
            dimension_semantics=("parallel",),
            vmem_limit_bytes=vmem_limit),
    )(xk, w1, b1, w2, b2)

    return out


def init_params(key, dim, pred_dim):
    """Parameters in PyTorch layout: Linear weight is (out_features, in_features)."""
    ks = jax.random.split(key, 8)
    return {
        "w1": 0.1 * jax.random.normal(ks[0], (pred_dim, dim), jnp.float32),
        "b1": 0.1 * jax.random.normal(ks[1], (pred_dim,), jnp.float32),
        "bn_gamma": 1.0 + 0.1 * jax.random.normal(ks[2], (pred_dim,), jnp.float32),
        "bn_beta": 0.1 * jax.random.normal(ks[3], (pred_dim,), jnp.float32),
        "bn_mean": 0.1 * jax.random.normal(ks[4], (pred_dim,), jnp.float32),
        "bn_var": jnp.abs(0.1 * jax.random.normal(ks[5], (pred_dim,), jnp.float32)) + 1.0,
        "w2": 0.1 * jax.random.normal(ks[6], (dim, pred_dim), jnp.float32),
        "b2": 0.1 * jax.random.normal(ks[7], (dim,), jnp.float32),
    }


def _ref_forward(x, p, eps=1e-5):
    """Plain-JAX f32 reference: Linear -> BatchNorm1d(eval) -> ReLU -> Linear."""
    h = x @ p["w1"].T + p["b1"]
    h = (h - p["bn_mean"]) / jnp.sqrt(p["bn_var"] + eps) * p["bn_gamma"] + p["bn_beta"]
    h = jnp.maximum(h, 0.0)
    return h @ p["w2"].T + p["b2"]


if __name__ == "__main__":
    key = jax.random.PRNGKey(0)
    kx, kp = jax.random.split(key)

    B, dim, pred_dim = 16, 128, 64       # small demo; pred_dim padded 64 -> 128 in-kernel
    x = jax.random.normal(kx, (B, dim), jnp.float32)
    params = init_params(kp, dim=dim, pred_dim=pred_dim)
    y_ref = _ref_forward(x, params)

    # bf16 MXU path (default): 2 grid steps of 8 rows -> exercises the parallel axis.
    fwd = jax.jit(predictor_forward)
    y = jax.block_until_ready(fwd(x, params))
    assert y.shape == (B, dim)
    assert jnp.allclose(y, y_ref, atol=5e-2, rtol=5e-2), \
        "Pallas bf16 output mismatch vs plain-JAX f32 reference"

    # f32 MXU path: verifies the BN-fold / padding math at tight tolerance.
    y32 = jax.block_until_ready(
        predictor_forward(x, params, compute_dtype=jnp.float32))
    assert jnp.allclose(y32, y_ref, atol=1e-4, rtol=1e-4), \
        "Pallas f32 output mismatch vs plain-JAX reference"

    # Ragged batch (B % tb != 0): Pallas masks the last block, no host pad/slice.
    kx2 = jax.random.split(kx)[0]
    x2 = jax.random.normal(kx2, (21, dim), jnp.float32)
    y2 = jax.block_until_ready(predictor_forward(x2, params))
    assert jnp.allclose(y2, _ref_forward(x2, params), atol=5e-2, rtol=5e-2)

    # Tiny batch (single block covering the whole batch).
    y3 = jax.block_until_ready(predictor_forward(x[:5], params))
    assert jnp.allclose(y3, y_ref[:5], atol=5e-2, rtol=5e-2)

    print("KERNEL_OK")
</pallas_src>

<mosaic_0001>
module attributes {stable_mosaic.version = 11 : i64} {
  func.func @_predictor_kernel(%arg0: i32, %arg1: memref<8x128xbf16, #tpu.memory_space<vmem>>, %arg2: memref<128x128xbf16, #tpu.memory_space<vmem>>, %arg3: memref<1x128xf32, #tpu.memory_space<vmem>>, %arg4: memref<128x128xbf16, #tpu.memory_space<vmem>>, %arg5: memref<1x128xf32, #tpu.memory_space<vmem>>, %arg6: memref<8x128xf32, #tpu.memory_space<vmem>>) attributes {dimension_semantics = [#tpu.dimension_semantics<parallel>], iteration_bounds = array<i64: 2>, scalar_prefetch = 0 : i64, scratch_operands = 0 : i64, tpu.core_type = #tpu.core_type<tc>, window_params = [{transform_indices = @transform_0, window_bounds = array<i64: 8, 128>}, {pipeline_mode = #tpu.pipeline_mode<synchronous>, transform_indices = @transform_1, window_bounds = array<i64: 128, 128>}, {pipeline_mode = #tpu.pipeline_mode<synchronous>, transform_indices = @transform_2, window_bounds = array<i64: 1, 128>}, {pipeline_mode = #tpu.pipeline_mode<synchronous>, transform_indices = @transform_3, window_bounds = array<i64: 128, 128>}, {pipeline_mode = #tpu.pipeline_mode<synchronous>, transform_indices = @transform_4, window_bounds = array<i64: 1, 128>}, {transform_indices = @transform_5, window_bounds = array<i64: 8, 128>}]} {
    %c0 = arith.constant 0 : index
    %c0_0 = arith.constant 0 : index
    %0 = vector.load %arg1[%c0, %c0_0] : memref<8x128xbf16, #tpu.memory_space<vmem>>, vector<8x128xbf16>
    %c0_1 = arith.constant 0 : index
    %c0_2 = arith.constant 0 : index
    %1 = vector.load %arg2[%c0_1, %c0_2] : memref<128x128xbf16, #tpu.memory_space<vmem>>, vector<128x128xbf16>
    %cst = arith.constant dense<0.000000e+00> : vector<8x128xf32>
    %2 = tpu.matmul %0, %1, %cst {dimension_numbers = #tpu.dot_dimension_numbers<[1], [0], [0], [1], [0, 0, 1, 1], [], []>} : vector<8x128xbf16>, vector<128x128xbf16>, vector<8x128xf32> -> vector<8x128xf32>
    %c0_3 = arith.constant 0 : index
    %c0_4 = arith.constant 0 : index
    %3 = vector.load %arg3[%c0_3, %c0_4] : memref<1x128xf32, #tpu.memory_space<vmem>>, vector<1x128xf32>
    %4 = vector.broadcast %3 : vector<1x128xf32> to vector<8x128xf32>
    %5 = arith.addf %2, %4 : vector<8x128xf32>
    %cst_5 = arith.constant 0.000000e+00 : f32
    %6 = vector.broadcast %cst_5 : f32 to vector<8x128xf32>
    %7 = arith.maximumf %5, %6 : vector<8x128xf32>
    %8 = arith.truncf %7 : vector<8x128xf32> to vector<8x128xbf16>
    %c0_6 = arith.constant 0 : index
    %c0_7 = arith.constant 0 : index
    %9 = vector.load %arg4[%c0_6, %c0_7] : memref<128x128xbf16, #tpu.memory_space<vmem>>, vector<128x128xbf16>
    %cst_8 = arith.constant dense<0.000000e+00> : vector<8x128xf32>
    %10 = tpu.matmul %8, %9, %cst_8 {dimension_numbers = #tpu.dot_dimension_numbers<[1], [0], [0], [1], [0, 0, 1, 1], [], []>} : vector<8x128xbf16>, vector<128x128xbf16>, vector<8x128xf32> -> vector<8x128xf32>
    %c0_9 = arith.constant 0 : index
    %c0_10 = arith.constant 0 : index
    %11 = vector.load %arg5[%c0_9, %c0_10] : memref<1x128xf32, #tpu.memory_space<vmem>>, vector<1x128xf32>
    %12 = vector.broadcast %11 : vector<1x128xf32> to vector<8x128xf32>
    %13 = arith.addf %10, %12 : vector<8x128xf32>
    %c0_11 = arith.constant 0 : index
    %c0_12 = arith.constant 0 : index
    %14 = vector.load %arg6[%c0_11, %c0_12] : memref<8x128xf32, #tpu.memory_space<vmem>>, vector<8x128xf32>
    tpu.vector_store %arg6[%c0_11, %c0_12], %13 {strides = array<i32>} : memref<8x128xf32, #tpu.memory_space<vmem>>, vector<8x128xf32>,
    return
  }
  func.func @transform_0(%arg0: i32) -> (i32, i32) {
    %c0_i32 = arith.constant 0 : i32
    %c0_i32_0 = arith.constant 0 : i32
    return %arg0, %c0_i32 : i32, i32
  }
  func.func @transform_1(%arg0: i32) -> (i32, i32) {
    %c0_i32 = arith.constant 0 : i32
    %c0_i32_0 = arith.constant 0 : i32
    %c0_i32_1 = arith.constant 0 : i32
    return %c0_i32, %c0_i32_0 : i32, i32
  }
  func.func @transform_2(%arg0: i32) -> (i32, i32) {
    %c0_i32 = arith.constant 0 : i32
    %c0_i32_0 = arith.constant 0 : i32
    %c0_i32_1 = arith.constant 0 : i32
    return %c0_i32, %c0_i32_0 : i32, i32
  }
  func.func @transform_3(%arg0: i32) -> (i32, i32) {
    %c0_i32 = arith.constant 0 : i32
    %c0_i32_0 = arith.constant 0 : i32
    %c0_i32_1 = arith.constant 0 : i32
    return %c0_i32, %c0_i32_0 : i32, i32
  }
  func.func @transform_4(%arg0: i32) -> (i32, i32) {
    %c0_i32 = arith.constant 0 : i32
    %c0_i32_0 = arith.constant 0 : i32
    %c0_i32_1 = arith.constant 0 : i32
    return %c0_i32, %c0_i32_0 : i32, i32
  }
  func.func @transform_5(%arg0: i32) -> (i32, i32) {
    %c0_i32 = arith.constant 0 : i32
    %c0_i32_0 = arith.constant 0 : i32
    return %arg0, %c0_i32 : i32, i32
  }
}

</mosaic_0001>

<llo_original>
// kernel: predictor_forward.1
$region0: #{predictor_forward.1}
  #allocation0 [shape = 'u32[]', space=smem, size = 0x4, offset = 0x4, fixed_abs, tag = 'smem constant byte address 0x4 - core index']
  #allocation1 [shape = 'u32[144,128]{1,0:T(1,128)}', space=vmem, size = 0x12000, scoped, tag = 'internal scratch']
  %s0 = inlined_call_operand.vmem [shape: bf16[16,128], index: 0, kind: input, shape index: {}]
  %s1 = inlined_call_operand.vmem [shape: bf16[128,128], index: 1, kind: input, shape index: {}]
  %s2 = inlined_call_operand.vmem [shape: f32[1,128], index: 2, kind: input, shape index: {}]
  %s3 = inlined_call_operand.vmem [shape: bf16[128,128], index: 3, kind: input, shape index: {}]
  %s4 = inlined_call_operand.vmem [shape: f32[1,128], index: 4, kind: input, shape index: {}]
  %s5 = inlined_call_operand.hbm [shape: f32[16,128], index: 5, kind: output, shape index: {}]
  %s6 = sld [smem:[#allocation0]]
  $region53: #{predictor_forward.1} parent=0
    _
  %s8 = ssub.s32 1, %s6
  %s9 = scalar_select 0, %s8, %s6
  $region1: #{predictor_forward.1} parent=0
    #allocation2 [shape = 'u8[8192]{0}', space=vmem, size = 0x2000, scoped, tag = 'output window, operand 0']
    #allocation3 [shape = 's32[2]{0}', space=sflag, size = 0x8, scoped, tag = 'scoped memory for predictor_forward.1']
    %10 = vsyncpa [#allocation3], 0
    %s11 = scalar_lea.sflag [#allocation3], 1
    %12 = vsyncpa %s11, 0
    loop: start=0, step=1, limit=4
    $region2: #{predictor_forward.1} parent=1 // loop_pre_header
      _
    $region3: #{predictor_forward.1} parent=1 // loop_header
      %s14 = sphi 0, %s18
      %p15 = scmp.ge.s32.totalorder %s14, 4
      %s24 = sphi 0, %s26
      %s27 = sphi 0, %s24
      %s28 = sphi 0, %s27
      %s44 = sphi 0, %s28
      %s48 = sphi 0, %s48
      %s50 = sphi 0, %s48
      %s51 = sphi 0, %s50
      %s65 = sphi 0, %s51
      %s69 = sphi 0, %s69
      %s71 = sphi 0, %s69
      %s72 = sphi 0, %s71
      %s86 = sphi 0, %s72
      %s90 = sphi 0, %s90
      %s92 = sphi 0, %s90
      %s93 = sphi 0, %s92
      %s107 = sphi 0, %s93
      %s111 = sphi 0, %s111
      %s113 = sphi 0, %s111
      %s114 = sphi 0, %s113
      %s128 = sphi 0, %s114
      %s134 = sphi 0, %s136
      %s137 = sphi 0, %s134
      %s138 = sphi 0, %s137
      %s154 = sphi 0, %s138
    $region4: #{predictor_forward.1} parent=1 // loop_header_branch
      %17 = sbr.rel (%p15) target = $region8
    $region5: #{predictor_forward.1} parent=1 // loop_body
      %s19 = ssub.s32 %s14, 1
      %s20 = ssub.s32 %s14, 2
      %s21 = sadd.s32 %s14, 1
      %s22 = ssub.s32 %s14, %s21
      %p23 = scmp.eq.s32.totalorder %s22, 0
      %s25 = sadd.s32 %s24, 1
      %s26 = scalar_select %p23, %s24, %s25
      %p29 = pneg %p23
      %p30 = scmp.eq.s32.totalorder %s14, 1
      %p31 = por %p29, %p30
      %p32 = scmp.ne.s32.totalorder %s24, %s27
      %p33 = scmp.eq.s32.totalorder %s14, 0
      %p34 = por %p32, %p33
      %p35 = scmp.ne.s32.totalorder %s24, %s27
      %p36 = scmp.eq.s32.totalorder %s19, 1
      %p37 = por %p35, %p36
      %p38 = scmp.ne.s32.totalorder %s27, %s28
      %p39 = scmp.eq.s32.totalorder %s19, 0
      %p40 = por %p38, %p39
      %p41 = scmp.ne.s32.totalorder %s27, %s28
      %p42 = scmp.eq.s32.totalorder %s20, 1
      %p43 = por %p41, %p42
      %p45 = scmp.ne.s32.totalorder %s28, %s44
      %p46 = scmp.eq.s32.totalorder %s20, 0
      %p47 = por %p45, %p46
      %s49 = sadd.s32 %s48, 1
      %p52 = scmp.eq.s32.totalorder %s14, 1
      %p53 = scmp.ne.s32.totalorder %s48, %s50
      %p54 = scmp.eq.s32.totalorder %s14, 0
      %p55 = por %p53, %p54
      %p56 = scmp.ne.s32.totalorder %s48, %s50
      %p57 = scmp.eq.s32.totalorder %s19, 1
      %p58 = por %p56, %p57
      %p59 = scmp.ne.s32.totalorder %s50, %s51
      %p60 = scmp.eq.s32.totalorder %s19, 0
      %p61 = por %p59, %p60
      %p62 = scmp.ne.s32.totalorder %s50, %s51
      %p63 = scmp.eq.s32.totalorder %s20, 1
      %p64 = por %p62, %p63
      %p66 = scmp.ne.s32.totalorder %s51, %s65
      %p67 = scmp.eq.s32.totalorder %s20, 0
      %p68 = por %p66, %p67
      %s70 = sadd.s32 %s69, 1
      %p73 = scmp.eq.s32.totalorder %s14, 1
      %p74 = scmp.ne.s32.totalorder %s69, %s71
      %p75 = scmp.eq.s32.totalorder %s14, 0
      %p76 = por %p74, %p75
      %p77 = scmp.ne.s32.totalorder %s69, %s71
      %p78 = scmp.eq.s32.totalorder %s19, 1
      %p79 = por %p77, %p78
      %p80 = scmp.ne.s32.totalorder %s71, %s72
      %p81 = scmp.eq.s32.totalorder %s19, 0
      %p82 = por %p80, %p81
      %p83 = scmp.ne.s32.totalorder %s71, %s72
      %p84 = scmp.eq.s32.totalorder %s20, 1
      %p85 = por %p83, %p84
      %p87 = scmp.ne.s32.totalorder %s72, %s86
      %p88 = scmp.eq.s32.totalorder %s20, 0
      %p89 = por %p87, %p88
      %s91 = sadd.s32 %s90, 1
      %p94 = scmp.eq.s32.totalorder %s14, 1
      %p95 = scmp.ne.s32.totalorder %s90, %s92
      %p96 = scmp.eq.s32.totalorder %s14, 0
      %p97 = por %p95, %p96
      %p98 = scmp.ne.s32.totalorder %s90, %s92
      %p99 = scmp.eq.s32.totalorder %s19, 1
      %p100 = por %p98, %p99
      %p101 = scmp.ne.s32.totalorder %s92, %s93
      %p102 = scmp.eq.s32.totalorder %s19, 0
      %p103 = por %p101, %p102
      %p104 = scmp.ne.s32.totalorder %s92, %s93
      %p105 = scmp.eq.s32.totalorder %s20, 1
      %p106 = por %p104, %p105
      %p108 = scmp.ne.s32.totalorder %s93, %s107
      %p109 = scmp.eq.s32.totalorder %s20, 0
      %p110 = por %p108, %p109
      %s112 = sadd.s32 %s111, 1
      %p115 = scmp.eq.s32.totalorder %s14, 1
      %p116 = scmp.ne.s32.totalorder %s111, %s113
      %p117 = scmp.eq.s32.totalorder %s14, 0
      %p118 = por %p116, %p117
      %p119 = scmp.ne.s32.totalorder %s111, %s113
      %p120 = scmp.eq.s32.totalorder %s19, 1
      %p121 = por %p119, %p120
      %p122 = scmp.ne.s32.totalorder %s113, %s114
      %p123 = scmp.eq.s32.totalorder %s19, 0
      %p124 = por %p122, %p123
      %p125 = scmp.ne.s32.totalorder %s113, %s114
      %p126 = scmp.eq.s32.totalorder %s20, 1
      %p127 = por %p125, %p126
      %p129 = scmp.ne.s32.totalorder %s114, %s128
      %p130 = scmp.eq.s32.totalorder %s20, 0
      %p131 = por %p129, %p130
      %s132 = ssub.s32 %s14, %s21
      %p133 = scmp.eq.s32.totalorder %s132, 0
      %s135 = sadd.s32 %s134, 1
      %s136 = scalar_select %p133, %s134, %s135
      %p139 = pneg %p133
      %p140 = scmp.eq.s32.totalorder %s14, 1
      %p141 = por %p139, %p140
      %p142 = scmp.ne.s32.totalorder %s134, %s137
      %p143 = scmp.eq.s32.totalorder %s14, 0
      %p144 = por %p142, %p143
      %p145 = scmp.ne.s32.totalorder %s134, %s137
      %p146 = scmp.eq.s32.totalorder %s19, 1
      %p147 = por %p145, %p146
      %p148 = scmp.ne.s32.totalorder %s137, %s138
      %p149 = scmp.eq.s32.totalorder %s19, 0
      %p150 = por %p148, %p149
      %p151 = scmp.ne.s32.totalorder %s137, %s138
      %p152 = scmp.eq.s32.totalorder %s20, 1
      %p153 = por %p151, %p152
      %p155 = scmp.ne.s32.totalorder %s138, %s154
      %p156 = scmp.eq.s32.totalorder %s20, 0
      %p157 = por %p155, %p156
      %p158 = scmp.le.s32.totalorder 1, %s14
      %p159 = scmp.lt.s32.totalorder %s14, 3
      %p160 = pnand %p158, %p159
      %p161 = pneg %p160
      // Predicated region
      $region9: #{predictor_forward.1} parent=5 // pred_check
        _
      $region10: #{predictor_forward.1} parent=5 // pred_check_branch
        %163 = sbr.rel (%p160) target = $region12
      $region11: #{predictor_forward.1} parent=5 // pred_region
        %s164 = ssub.s32 %s14, 1
        // Predicated region
        $region13: #{predictor_forward.1} parent=11 // pred_check
          %p165 = pneg %p61
        $region14: #{predictor_forward.1} parent=11 // pred_check_branch
          %167 = sbr.rel (%p165) target = $region16
        $region15: #{predictor_forward.1} parent=11 // pred_region
          _
        $region16: #{predictor_forward.1} parent=11 // pred_fallthru
          _
        // Predicated region
        $region17: #{predictor_forward.1} parent=11 // pred_check
          %p168 = pneg %p82
        $region18: #{predictor_forward.1} parent=11 // pred_check_branch
          %170 = sbr.rel (%p168) target = $region20
        $region19: #{predictor_forward.1} parent=11 // pred_region
          _
        $region20: #{predictor_forward.1} parent=11 // pred_fallthru
          _
        // Predicated region
        $region21: #{predictor_forward.1} parent=11 // pred_check
          %p171 = pneg %p103
        $region22: #{predictor_forward.1} parent=11 // pred_check_branch
          %173 = sbr.rel (%p171) target = $region24
        $region23: #{predictor_forward.1} parent=11 // pred_region
          _
        $region24: #{predictor_forward.1} parent=11 // pred_fallthru
          _
        // Predicated region
        $region25: #{predictor_forward.1} parent=11 // pred_check
          %p174 = pneg %p124
        $region26: #{predictor_forward.1} parent=11 // pred_check_branch
          %176 = sbr.rel (%p174) target = $region28
        $region27: #{predictor_forward.1} parent=11 // pred_region
          _
        $region28: #{predictor_forward.1} parent=11 // pred_fallthru
          _
      $region12: #{predictor_forward.1} parent=5 // pred_fallthru
        _
      %p177 = scmp.lt.s32.totalorder %s14, 2
      // Predicated region
      $region29: #{predictor_forward.1} parent=5 // pred_check
        %p178 = pneg %p177
      $region30: #{predictor_forward.1} parent=5 // pred_check_branch
        %180 = sbr.rel (%p178) target = $region32
      $region31: #{predictor_forward.1} parent=5 // pred_region
        // Predicated region
        $region33: #{predictor_forward.1} parent=31 // pred_check
          %p181 = pneg %p34
        $region34: #{predictor_forward.1} parent=31 // pred_check_branch
          %183 = sbr.rel (%p181) target = $region36
        $region35: #{predictor_forward.1} parent=31 // pred_region
          %p184 = scmp.lt.s32.totalorder %s14, 1
          %s185 = scalar_select %p184, %s14, 1
          %s186 = smul.addr %s185, 4
          %s187 = scalar_lea.vmem %s0, %s186
        $region36: #{predictor_forward.1} parent=31 // pred_fallthru
          _
      $region32: #{predictor_forward.1} parent=5 // pred_fallthru
        _
      %p188 = scmp.le.s32.totalorder 1, %s14
      %p189 = scmp.lt.s32.totalorder %s14, 3
      %p190 = pnand %p188, %p189
      %p191 = pneg %p190
      // Predicated region
      $region37: #{predictor_forward.1} parent=5 // pred_check
        _
      $region38: #{predictor_forward.1} parent=5 // pred_check_branch
        %193 = sbr.rel (%p190) target = $region40
      $region39: #{predictor_forward.1} parent=5 // pred_region
        %s194 = ssub.s32 %s14, 1
        %p195 = scmp.lt.s32.totalorder %s19, 1
        %s196 = scalar_select %p195, %s19, 1
        %s197 = smul.addr %s196, 4
        %s198 = scalar_lea.vmem %s0, %s197
        %p199 = pneg %p40
        %p200 = pneg %p37
        %p201 = pneg %p61
        %p202 = pneg %p58
        %p203 = pneg %p82
        %p204 = pneg %p79
        %p205 = pneg %p103
        %p206 = pneg %p100
        %p207 = pneg %p124
        %p208 = pneg %p121
        %p209 = pneg %p150
        %p210 = pneg %p147
        %s211 = sand.u32 %s137, 1
        %s212 = scalar_lea.sflag [#allocation3], %s211
        %s213 = sand.u32 %s137, 1
        %s214 = smul.addr %s213, 8
        %s215 = scalar_lea.vmem [#allocation2], %s214
        %p216 = scmp.lt.s32.totalorder %s19, 1
        %s217 = scalar_select %p216, %s19, 1
        %s218 = smul.addr %s217, 4
        %s219 = scalar_lea.vmem %s0, %s218
        %v221 = vld [vmem:[%s219] sm:$0xf]
        %v222 = vld [vmem:[%s1] sm:$0xf]
        %v223 = vld [vmem:[%s1 + $0x4] sm:$0xf]
        %v224 = vld [vmem:[%s1 + $0x8] sm:$0xf]
        %v225 = vld [vmem:[%s1 + $0xc] sm:$0xf]
        %v226 = vld [vmem:[%s1 + $0x10] sm:$0xf]
        %v227 = vld [vmem:[%s1 + $0x14] sm:$0xf]
        %v228 = vld [vmem:[%s1 + $0x18] sm:$0xf]
        %v229 = vld [vmem:[%s1 + $0x1c] sm:$0xf]
        %v230 = vld [vmem:[%s1 + $0x20] sm:$0xf]
        %v231 = vld [vmem:[%s1 + $0x24] sm:$0xf]
        %v232 = vld [vmem:[%s1 + $0x28] sm:$0xf]
        %v233 = vld [vmem:[%s1 + $0x2c] sm:$0xf]
        %v234 = vld [vmem:[%s1 + $0x30] sm:$0xf]
        %v235 = vld [vmem:[%s1 + $0x34] sm:$0xf]
        %v236 = vld [vmem:[%s1 + $0x38] sm:$0xf]
        %v237 = vld [vmem:[%s1 + $0x3c] sm:$0xf]
        %v238 = vld [vmem:[%s2] sm:$0x1]
        %v240 = vlaneseq
        %v241 = vshrl.u32 %v240, 7
        %v242 = vsub.s32 0, %v241
        %v243 = vrot.slane %v238, %v242
        %v261 = vunpack.c.l.b16 %v222
        %v262 = vunpack.c.l.b16 %v223
        %v263 = vunpack.c.l.b16 %v224
        %v264 = vunpack.c.l.b16 %v225
        %v265 = vunpack.c.l.b16 %v226
        %v266 = vunpack.c.l.b16 %v227
        %v267 = vunpack.c.l.b16 %v228
        %v268 = vunpack.c.l.b16 %v229
        %v269 = vunpack.c.l.b16 %v230
        %v270 = vunpack.c.l.b16 %v231
        %v271 = vunpack.c.l.b16 %v232
        %v272 = vunpack.c.l.b16 %v233
        %v273 = vunpack.c.l.b16 %v234
        %v274 = vunpack.c.l.b16 %v235
        %v275 = vunpack.c.l.b16 %v236
        %v276 = vunpack.c.l.b16 %v237
        %v277 = vpack.c.b16 %v262, %v261
        %v278 = vpack.c.b16 %v264, %v263
        %v279 = vpack.c.b16 %v266, %v265
        %v280 = vpack.c.b16 %v268, %v267
        %v281 = vpack.c.b16 %v270, %v269
        %v282 = vpack.c.b16 %v272, %v271
        %v283 = vpack.c.b16 %v274, %v273
        %v284 = vpack.c.b16 %v276, %v275
        %293 = vmatprep.subr.bf16.mxu0 0
        %294 = vmatpush1.bf16.msra.mxu0 %v277
        %295 = vmatprep.subr.bf16.mxu0 0
        %296 = vmatpush1.bf16.msra.mxu0 %v278
        %297 = vmatprep.subr.bf16.mxu0 0
        %298 = vmatpush1.bf16.msra.mxu0 %v279
        %299 = vmatprep.subr.bf16.mxu0 0
        %300 = vmatpush1.bf16.msra.mxu0 %v280
        %301 = vmatprep.subr.bf16.mxu0 0
        %302 = vmatpush1.bf16.msra.mxu0 %v281
        %303 = vmatprep.subr.bf16.mxu0 0
        %304 = vmatpush1.bf16.msra.mxu0 %v282
        %305 = vmatprep.subr.bf16.mxu0 0
        %306 = vmatpush1.bf16.msra.mxu0 %v283
        %307 = vmatprep.subr.bf16.mxu0 0
        %308 = vmatpush1.bf16.msra.mxu0 %v284
        %309 = vmatprep.subr.bf16.mxu0 0
        %310 = vmatpush1.bf16.msra.mxu0 0
        %311 = vmatprep.subr.bf16.mxu0 0
        %312 = vmatpush1.bf16.msra.mxu0 0
        %313 = vmatprep.subr.bf16.mxu0 0
        %314 = vmatpush1.bf16.msra.mxu0 0
        %315 = vmatprep.subr.bf16.mxu0 0
        %316 = vmatpush1.bf16.msra.mxu0 0
        %317 = vmatprep.subr.bf16.mxu0 0
        %318 = vmatpush1.bf16.msra.mxu0 0
        %319 = vmatprep.subr.bf16.mxu0 0
        %320 = vmatpush1.bf16.msra.mxu0 0
        %321 = vmatprep.subr.bf16.mxu0 0
        %322 = vmatpush1.bf16.msra.mxu0 0
        %323 = vmatprep.subr.bf16.mxu0 0
        %324 = vmatpush1.bf16.msra.mxu0 0
        %325 = vmatprep.mubr.bf16.mxu0 0
        %326 = vmatmul.mubr.bf16.gmra.mrb[0].mxu0 %v221
        %v327 = vpop.f32.mrb[0].mxu0
        %v328 = vadd.f32 %v243, %v327
        %v329 = vpop.f32.mrb[0].mxu0
        %v330 = vpop.f32.mrb[0].mxu0
        %v331 = vpop.f32.mrb[0].mxu0
        %332 = vdwg.mxu0
        %v333 = vmax.f32 %v328, 0.0
        %v334 = vpack.c.bf16 %v333, %v333
        %v335 = vld [vmem:[%s3] sm:$0xf]
        %v336 = vld [vmem:[%s3 + $0x4] sm:$0xf]
        %v337 = vld [vmem:[%s3 + $0x8] sm:$0xf]
        %v338 = vld [vmem:[%s3 + $0xc] sm:$0xf]
        %v339 = vld [vmem:[%s3 + $0x10] sm:$0xf]
        %v340 = vld [vmem:[%s3 + $0x14] sm:$0xf]
        %v341 = vld [vmem:[%s3 + $0x18] sm:$0xf]
        %v342 = vld [vmem:[%s3 + $0x1c] sm:$0xf]
        %v343 = vld [vmem:[%s3 + $0x20] sm:$0xf]
        %v344 = vld [vmem:[%s3 + $0x24] sm:$0xf]
        %v345 = vld [vmem:[%s3 + $0x28] sm:$0xf]
        %v346 = vld [vmem:[%s3 + $0x2c] sm:$0xf]
        %v347 = vld [vmem:[%s3 + $0x30] sm:$0xf]
        %v348 = vld [vmem:[%s3 + $0x34] sm:$0xf]
        %v349 = vld [vmem:[%s3 + $0x38] sm:$0xf]
        %v350 = vld [vmem:[%s3 + $0x3c] sm:$0xf]
        %v351 = vld [vmem:[%s4] sm:$0x1]
        %v353 = vlaneseq
        %v354 = vshrl.u32 %v353, 7
        %v355 = vsub.s32 0, %v354
        %v356 = vrot.slane %v351, %v355
        %v374 = vunpack.c.l.b16 %v335
        %v375 = vunpack.c.l.b16 %v336
        %v376 = vunpack.c.l.b16 %v337
        %v377 = vunpack.c.l.b16 %v338
        %v378 = vunpack.c.l.b16 %v339
        %v379 = vunpack.c.l.b16 %v340
        %v380 = vunpack.c.l.b16 %v341
        %v381 = vunpack.c.l.b16 %v342
        %v382 = vunpack.c.l.b16 %v343
        %v383 = vunpack.c.l.b16 %v344
        %v384 = vunpack.c.l.b16 %v345
        %v385 = vunpack.c.l.b16 %v346
        %v386 = vunpack.c.l.b16 %v347
        %v387 = vunpack.c.l.b16 %v348
        %v388 = vunpack.c.l.b16 %v349
        %v389 = vunpack.c.l.b16 %v350
        %v390 = vpack.c.b16 %v375, %v374
        %v391 = vpack.c.b16 %v377, %v376
        %v392 = vpack.c.b16 %v379, %v378
        %v393 = vpack.c.b16 %v381, %v380
        %v394 = vpack.c.b16 %v383, %v382
        %v395 = vpack.c.b16 %v385, %v384
        %v396 = vpack.c.b16 %v387, %v386
        %v397 = vpack.c.b16 %v389, %v388
        %406 = vmatprep.subr.bf16.mxu0 0
        %407 = vmatpush1.bf16.msra.mxu0 %v390
        %408 = vmatprep.subr.bf16.mxu0 0
        %409 = vmatpush1.bf16.msra.mxu0 %v391
        %410 = vmatprep.subr.bf16.mxu0 0
        %411 = vmatpush1.bf16.msra.mxu0 %v392
        %412 = vmatprep.subr.bf16.mxu0 0
        %413 = vmatpush1.bf16.msra.mxu0 %v393
        %414 = vmatprep.subr.bf16.mxu0 0
        %415 = vmatpush1.bf16.msra.mxu0 %v394
        %416 = vmatprep.subr.bf16.mxu0 0
        %417 = vmatpush1.bf16.msra.mxu0 %v395
        %418 = vmatprep.subr.bf16.mxu0 0
        %419 = vmatpush1.bf16.msra.mxu0 %v396
        %420 = vmatprep.subr.bf16.mxu0 0
        %421 = vmatpush1.bf16.msra.mxu0 %v397
        %422 = vmatprep.subr.bf16.mxu0 0
        %423 = vmatpush1.bf16.msra.mxu0 0
        %424 = vmatprep.subr.bf16.mxu0 0
        %425 = vmatpush1.bf16.msra.mxu0 0
        %426 = vmatprep.subr.bf16.mxu0 0
        %427 = vmatpush1.bf16.msra.mxu0 0
        %428 = vmatprep.subr.bf16.mxu0 0
        %429 = vmatpush1.bf16.msra.mxu0 0
        %430 = vmatprep.subr.bf16.mxu0 0
        %431 = vmatpush1.bf16.msra.mxu0 0
        %432 = vmatprep.subr.bf16.mxu0 0
        %433 = vmatpush1.bf16.msra.mxu0 0
        %434 = vmatprep.subr.bf16.mxu0 0
        %435 = vmatpush1.bf16.msra.mxu0 0
        %436 = vmatprep.subr.bf16.mxu0 0
        %437 = vmatpush1.bf16.msra.mxu0 0
        %438 = vmatprep.mubr.bf16.mxu0 0
        %439 = vmatmul.mubr.bf16.gmra.mrb[0].mxu0 %v334
        %v440 = vpop.f32.mrb[0].mxu0
        %v441 = vadd.f32 %v356, %v440
        %v442 = vpop.f32.mrb[0].mxu0
        %v443 = vpop.f32.mrb[0].mxu0
        %v444 = vpop.f32.mrb[0].mxu0
        %445 = vdwg.mxu0
        %446 = vst [vmem:[%s215] sm:$0xff] %v441
        %s447 = sand.u32 %s137, 1
        %s448 = scalar_lea.sflag [#allocation3], %s447
        %s449 = sand.u32 %s137, 1
        %s450 = smul.addr %s449, 8
        %s451 = scalar_lea.vmem [#allocation2], %s450
        // Predicated region
        $region41: #{predictor_forward.1} parent=39 // pred_check
          %p452 = pneg %p147
        $region42: #{predictor_forward.1} parent=39 // pred_check_branch
          %454 = sbr.rel (%p452) target = $region44
        $region43: #{predictor_forward.1} parent=39 // pred_region
          %s456 = ssub.s32 128, 128
          %457 = vsyncadd %s448, %s456
          %s458 = smul.addr %s19, 128
          %s459 = scalar_lea.hbm %s5, %s458
          %s461 = sshll.u32 %s451, 4
          %s462 = int_to_ptr.vmem [resolvable:$true] %s461
          %464 = dma.vmem_to_hbm [thread:$0]  %s462, 128, %s459, %s448
        $region44: #{predictor_forward.1} parent=39 // pred_fallthru
          _
      $region40: #{predictor_forward.1} parent=5 // pred_fallthru
        _
      %p465 = scmp.le.s32.totalorder 2, %s14
      // Predicated region
      $region45: #{predictor_forward.1} parent=5 // pred_check
        %p466 = pneg %p465
      $region46: #{predictor_forward.1} parent=5 // pred_check_branch
        %468 = sbr.rel (%p466) target = $region48
      $region47: #{predictor_forward.1} parent=5 // pred_region
        %s469 = ssub.s32 %s14, 2
        // Predicated region
        $region49: #{predictor_forward.1} parent=47 // pred_check
          %p470 = pneg %p153
        $region50: #{predictor_forward.1} parent=47 // pred_check_branch
          %472 = sbr.rel (%p470) target = $region52
        $region51: #{predictor_forward.1} parent=47 // pred_region
          %s473 = sand.u32 %s138, 1
          %s474 = scalar_lea.sflag [#allocation3], %s473
          %s475 = sand.u32 %s138, 1
          %s476 = smul.addr %s475, 8
          %s477 = scalar_lea.vmem [#allocation2], %s476
          %478 = dma.done %s474, 128
        $region52: #{predictor_forward.1} parent=47 // pred_fallthru
          _
      $region48: #{predictor_forward.1} parent=5 // pred_fallthru
        _
    $region6: #{predictor_forward.1} parent=1 // loop_footer
      %s18 = sadd.s32 1, %s14
    $region7: #{predictor_forward.1} parent=1 // loop_footer_branch
      %13 = sbr.rel target = $region3
    $region8: #{predictor_forward.1} parent=1 // loop_exit
      _
    %479 = vsyncpa [#allocation3], 1
    %s480 = scalar_lea.sflag [#allocation3], 1
    %481 = vsyncpa %s480, 1

</llo_original>
